<compile_context>
chip_gen: v6e
topology: v6e:2x2x1
jax: 0.10.0
libtpu: 0.0.40
codegen_flags: <defaults>
</compile_context>

<pallas_src>
import math
from functools import partial

import jax
import jax.numpy as jnp
from jax import lax
from jax.experimental import pallas as pl
from jax.experimental.pallas import tpu as pltpu


def patch_embed_kernel(p_ref, w_ref, b_ref, o_ref):
    # p_ref: (K, tm)  patches (K on sublanes, patch index on lanes)
    # w_ref: (K, tn)  flattened conv weight
    # b_ref: (1, tn)  bias (f32)
    # o_ref: (tm, tn) output tile
    acc = lax.dot_general(
        p_ref[...], w_ref[...],
        dimension_numbers=(((0,), (0,)), ((), ())),   # contract over K (sublane axis)
        preferred_element_type=jnp.float32,
    )
    acc = acc + b_ref[...]                             # (tm, tn) + (1, tn) broadcast, f32
    o_ref[...] = jnp.maximum(acc, 0.0).astype(o_ref.dtype)


def mask_embedding_forward(x, weight, bias, t_patch_size, *,
                           compute_dtype=None, out_dtype=None, tm_max=1024):
    """x: (B, c_in, L); weight: (d_model, c_in, k); bias: (d_model,)
    -> (B, L_out, d_model) == relu(conv1d(x, stride=k)).permute(0, 2, 1)."""
    B, C, L = x.shape
    N = weight.shape[0]
    k = t_patch_size
    L_out = (L - k) // k + 1
    M, K = B * L_out, C * k

    compute_dtype = x.dtype if compute_dtype is None else compute_dtype
    out_dtype = x.dtype if out_dtype is None else out_dtype

    # Patch matrix in (K, M) layout: lane dim = M (large, dense), sublane dim = K.
    # Row index = c*k + j matches weight.reshape(N, C*k); column index = b*L_out + l.
    # One fused XLA transpose(+cast) pass over the activations (same pass count as
    # before), but the result has no 128-lane padding blow-up.
    # TODO(synk): fuse the patch gather into the kernel (keep x in native (B, C, L)
    # layout and regroup L -> (patch, k) in VMEM) to drop this XLA pass entirely.
    xp = x[:, :, : L_out * k].reshape(B, C, L_out, k)
    xp = jnp.transpose(xp, (1, 3, 0, 2)).reshape(K, M).astype(compute_dtype)   # (K, M)

    w2d = weight.reshape(N, K).T.astype(compute_dtype)       # (K, N)
    b2d = bias.reshape(1, N).astype(jnp.float32)             # (1, N), f32 bias-add

    # Tile sizes. Blocks need not divide M/N (pl.cdiv grid + partial edge blocks); they
    # only need lane dim %128 == 0 (or == full dim) and sublane dim %8 == 0 (or == full).
    tn = N if N <= 2048 else 1024
    n_tiles = pl.cdiv(N, tn)
    if M <= tm_max:
        tm = M
        # v7x megacore guard: with a single N tile, give the M axis >= 2 tiles whenever
        # that is possible without breaking the 128-lane block constraint on xp.
        if n_tiles == 1 and M >= 256 and M % 256 == 0:
            tm = M // 2
    else:
        tm = tm_max                                           # multiple of 128
    m_tiles = pl.cdiv(M, tm)
    grid = (m_tiles, n_tiles)

    in_bytes = jnp.dtype(compute_dtype).itemsize
    out_bytes = jnp.dtype(out_dtype).itemsize
    # N is the innermost grid axis: patches streamed exactly once (resident over the N
    # sweep); weight/bias re-fetched once per M tile.
    cost = pl.CostEstimate(
        flops=2 * M * K * N,
        transcendentals=0,
        bytes_accessed=(K * M * in_bytes
                        + m_tiles * (K * N * in_bytes + N * 4)
                        + M * N * out_bytes),
    )

    out = pl.pallas_call(
        patch_embed_kernel,
        out_shape=jax.ShapeDtypeStruct((M, N), out_dtype),
        grid=grid,
        in_specs=[
            pl.BlockSpec((K, tm), lambda i, j: (0, i)),   # patches: resident over N sweep
            pl.BlockSpec((K, tn), lambda i, j: (0, j)),   # weight: re-fetched per step
            pl.BlockSpec((1, tn), lambda i, j: (0, j)),   # bias
        ],
        out_specs=pl.BlockSpec((tm, tn), lambda i, j: (i, j)),
        compiler_params=pltpu.CompilerParams(
            dimension_semantics=("parallel", "parallel"),
            vmem_limit_bytes=48 * 1024 * 1024,            # v7x-safe (64 MiB physical)
        ),
        cost_estimate=cost,
    )(xp, w2d, b2d)

    # (M, N) -> (B, L_out, N): splits the leading dim only -> free metadata reshape.
    return out.reshape(B, L_out, N)


if __name__ == "__main__":
    # Small shapes consistent with the module.
    B, c_in, L = 2, 4, 16
    d_model, t_patch_size = 32, 4

    key = jax.random.PRNGKey(0)
    kx, kw, kb = jax.random.split(key, 3)

    # Deterministic init mirroring torch: kaiming_normal_ weight, default conv bias.
    fan_in = c_in * t_patch_size
    weight = jax.random.normal(kw, (d_model, c_in, t_patch_size), jnp.float32) * math.sqrt(2.0 / fan_in)
    bound = 1.0 / math.sqrt(fan_in)
    bias = jax.random.uniform(kb, (d_model,), jnp.float32, minval=-bound, maxval=bound)
    x = jax.random.normal(kx, (B, c_in, L), jnp.float32)

    L_out = (L - t_patch_size) // t_patch_size + 1

    # Full-precision conv1d + relu + permute reference (PyTorch semantics).
    y_ref = lax.conv_general_dilated(
        x, weight, window_strides=(t_patch_size,), padding="VALID",
        dimension_numbers=("NCH", "OIH", "NCH"),
    ) + bias[None, :, None]
    y_ref = jnp.transpose(jnp.maximum(y_ref, 0.0), (0, 2, 1))

    # Default path: stream and emit in the activation dtype (f32 here) -> strict parity.
    fwd = jax.jit(partial(mask_embedding_forward, t_patch_size=t_patch_size))
    y = jax.block_until_ready(fwd(x, weight, bias))
    assert y.shape == (B, L_out, d_model), y.shape
    assert y.dtype == x.dtype, y.dtype
    assert jnp.allclose(y, y_ref, atol=1e-4, rtol=1e-4), float(jnp.max(jnp.abs(y - y_ref)))

    # Bandwidth-optimized path: bf16 streaming + bf16 output (halves HBM traffic).
    fwd_bf16 = jax.jit(partial(mask_embedding_forward, t_patch_size=t_patch_size,
                               compute_dtype=jnp.bfloat16, out_dtype=jnp.bfloat16))
    y_bf16 = jax.block_until_ready(fwd_bf16(x, weight, bias)).astype(jnp.float32)
    assert y_bf16.shape == (B, L_out, d_model), y_bf16.shape
    assert jnp.allclose(y_bf16, y_ref, atol=5e-2, rtol=5e-2), float(jnp.max(jnp.abs(y_bf16 - y_ref)))

    print("KERNEL_OK")
</pallas_src>

<mosaic_0001>
module attributes {stable_mosaic.version = 11 : i64} {
  func.func @patch_embed_kernel(%arg0: i32, %arg1: i32, %arg2: memref<16x8xf32, #tpu.memory_space<vmem>>, %arg3: memref<16x32xf32, #tpu.memory_space<vmem>>, %arg4: memref<1x32xf32, #tpu.memory_space<vmem>>, %arg5: memref<8x32xf32, #tpu.memory_space<vmem>>) attributes {dimension_semantics = [#tpu.dimension_semantics<parallel>, #tpu.dimension_semantics<parallel>], iteration_bounds = array<i64: 1, 1>, scalar_prefetch = 0 : i64, scratch_operands = 0 : i64, tpu.core_type = #tpu.core_type<tc>, window_params = [{transform_indices = @transform_0, window_bounds = array<i64: 16, 8>}, {transform_indices = @transform_1, window_bounds = array<i64: 16, 32>}, {transform_indices = @transform_2, window_bounds = array<i64: 1, 32>}, {transform_indices = @transform_3, window_bounds = array<i64: 8, 32>}]} {
    %c0 = arith.constant 0 : index
    %c0_0 = arith.constant 0 : index
    %0 = vector.load %arg2[%c0, %c0_0] : memref<16x8xf32, #tpu.memory_space<vmem>>, vector<16x8xf32>
    %c0_1 = arith.constant 0 : index
    %c0_2 = arith.constant 0 : index
    %1 = vector.load %arg3[%c0_1, %c0_2] : memref<16x32xf32, #tpu.memory_space<vmem>>, vector<16x32xf32>
    %cst = arith.constant dense<0.000000e+00> : vector<8x32xf32>
    %2 = tpu.matmul %0, %1, %cst {dimension_numbers = #tpu.dot_dimension_numbers<[0], [0], [1], [1], [0, 1, 1, 1], [], []>} : vector<16x8xf32>, vector<16x32xf32>, vector<8x32xf32> -> vector<8x32xf32>
    %c0_3 = arith.constant 0 : index
    %c0_4 = arith.constant 0 : index
    %3 = vector.load %arg4[%c0_3, %c0_4] : memref<1x32xf32, #tpu.memory_space<vmem>>, vector<1x32xf32>
    %4 = vector.broadcast %3 : vector<1x32xf32> to vector<8x32xf32>
    %5 = arith.addf %2, %4 : vector<8x32xf32>
    %cst_5 = arith.constant 0.000000e+00 : f32
    %6 = vector.broadcast %cst_5 : f32 to vector<8x32xf32>
    %7 = arith.maximumf %5, %6 : vector<8x32xf32>
    %c0_6 = arith.constant 0 : index
    %c0_7 = arith.constant 0 : index
    %8 = vector.load %arg5[%c0_6, %c0_7] : memref<8x32xf32, #tpu.memory_space<vmem>>, vector<8x32xf32>
    tpu.vector_store %arg5[%c0_6, %c0_7], %7 {strides = array<i32>} : memref<8x32xf32, #tpu.memory_space<vmem>>, vector<8x32xf32>,
    return
  }
  func.func @transform_0(%arg0: i32, %arg1: i32) -> (i32, i32) {
    %c0_i32 = arith.constant 0 : i32
    %c0_i32_0 = arith.constant 0 : i32
    return %c0_i32, %arg0 : i32, i32
  }
  func.func @transform_1(%arg0: i32, %arg1: i32) -> (i32, i32) {
    %c0_i32 = arith.constant 0 : i32
    %c0_i32_0 = arith.constant 0 : i32
    return %c0_i32, %arg1 : i32, i32
  }
  func.func @transform_2(%arg0: i32, %arg1: i32) -> (i32, i32) {
    %c0_i32 = arith.constant 0 : i32
    %c0_i32_0 = arith.constant 0 : i32
    return %c0_i32, %arg1 : i32, i32
  }
  func.func @transform_3(%arg0: i32, %arg1: i32) -> (i32, i32) {
    %c0_i32 = arith.constant 0 : i32
    return %arg0, %arg1 : i32, i32
  }
}

</mosaic_0001>

<llo_original>
// kernel: mask_embedding_forward.1
$region0: #{mask_embedding_forward.1}
  #allocation0 [shape = 'u32[]', space=smem, size = 0x4, offset = 0x4, fixed_abs, tag = 'smem constant byte address 0x4 - core index']
  #allocation1 [shape = 'u32[144,128]{1,0:T(1,128)}', space=vmem, size = 0x12000, scoped, tag = 'internal scratch']
  %s0 = inlined_call_operand.vmem [shape: f32[16,8], index: 0, kind: input, shape index: {}]
  %s1 = inlined_call_operand.vmem [shape: f32[16,32], index: 1, kind: input, shape index: {}]
  %s2 = inlined_call_operand.vmem [shape: f32[1,32], index: 2, kind: input, shape index: {}]
  %s3 = inlined_call_operand.hbm [shape: f32[8,32], index: 3, kind: output, shape index: {}]
  %s4 = sld [smem:[#allocation0]]
  $region22: #{mask_embedding_forward.1} parent=0
    _
  %s6 = ssub.s32 1, %s4
  %s7 = scalar_select 0, %s6, %s4
  $region1: #{mask_embedding_forward.1} parent=0
    #allocation2 [shape = 'u8[4096]{0}', space=vmem, size = 0x1000, scoped, tag = 'output window, operand 0, single buffered']
    #allocation3 [shape = 's32[1]{0}', space=sflag, size = 0x4, scoped, tag = 'scoped memory for mask_embedding_forward.1']
    %8 = vsyncpa [#allocation3], 0
    // Predicated region
    $region2: #{mask_embedding_forward.1} parent=1 // pred_check
      _
    $region3: #{mask_embedding_forward.1} parent=1 // pred_check_branch
      %10 = sbr.rel (0) target = $region5
    $region4: #{mask_embedding_forward.1} parent=1 // pred_region
      _
    $region5: #{mask_embedding_forward.1} parent=1 // pred_fallthru
      _
    // Predicated region
    $region6: #{mask_embedding_forward.1} parent=1 // pred_check
      _
    $region7: #{mask_embedding_forward.1} parent=1 // pred_check_branch
      %12 = sbr.rel (0) target = $region9
    $region8: #{mask_embedding_forward.1} parent=1 // pred_region
      _
    $region9: #{mask_embedding_forward.1} parent=1 // pred_fallthru
      _
    // Predicated region
    $region10: #{mask_embedding_forward.1} parent=1 // pred_check
      _
    $region11: #{mask_embedding_forward.1} parent=1 // pred_check_branch
      %14 = sbr.rel (0) target = $region13
    $region12: #{mask_embedding_forward.1} parent=1 // pred_region
      _
    $region13: #{mask_embedding_forward.1} parent=1 // pred_fallthru
      _
    %v15 = vld [vmem:[%s0] sm:$0xff]
    %v16 = vld [vmem:[%s0 + $0x8] sm:$0xff]
    %v17 = vld [vmem:[%s1] sm:$0xff]
    %v18 = vld [vmem:[%s1 + $0x8] sm:$0xff]
    %v19 = vld [vmem:[%s2] sm:$0x1]
    %v21 = vlaneseq
    %v22 = vshrl.u32 %v21, 7
    %v23 = vsub.s32 0, %v22
    %v24 = vrot.slane %v19, %v23
    %26 = vxpose.xlu0.b32.start [1/16] %v15, 128
    %27 = vxpose.xlu0.b32.cont [2/16] %v16, 128
    %28 = vxpose.xlu0.b32.cont [3/16] 0.0, 128
    %29 = vxpose.xlu0.b32.cont [4/16] 0.0, 128
    %30 = vxpose.xlu0.b32.cont [5/16] 0.0, 128
    %31 = vxpose.xlu0.b32.cont [6/16] 0.0, 128
    %32 = vxpose.xlu0.b32.cont [7/16] 0.0, 128
    %33 = vxpose.xlu0.b32.cont [8/16] 0.0, 128
    %34 = vxpose.xlu0.b32.cont [9/16] 0.0, 128
    %35 = vxpose.xlu0.b32.cont [10/16] 0.0, 128
    %36 = vxpose.xlu0.b32.cont [11/16] 0.0, 128
    %37 = vxpose.xlu0.b32.cont [12/16] 0.0, 128
    %38 = vxpose.xlu0.b32.cont [13/16] 0.0, 128
    %39 = vxpose.xlu0.b32.cont [14/16] 0.0, 128
    %40 = vxpose.xlu0.b32.cont [15/16] 0.0, 128
    %41 = vxpose.xlu0.b32.end [16/16] 0.0, 128
    %v42 = vpop.trf.xlu0
    %v43 = vpop.trf.xlu0
    %v44 = vpop.trf.xlu0
    %v45 = vpop.trf.xlu0
    %v46 = vpop.trf.xlu0
    %v47 = vpop.trf.xlu0
    %v48 = vpop.trf.xlu0
    %v49 = vpop.trf.xlu0
    %v50 = vpop.trf.xlu0
    %v51 = vpop.trf.xlu0
    %v52 = vpop.trf.xlu0
    %v53 = vpop.trf.xlu0
    %v54 = vpop.trf.xlu0
    %v55 = vpop.trf.xlu0
    %v56 = vpop.trf.xlu0
    %v57 = vpop.trf.xlu0
    %vm58 = vcmask 130048
    %v60 = vsel %vm58, %v42, 0
    %62 = vmatprep.subr.mxu0 0.0
    %63 = vmatpush1.msra.mxu0 0.0
    %64 = vmatprep.subr.mxu0 0.0
    %65 = vmatpush1.msra.mxu0 0.0
    %66 = vmatprep.subr.mxu0 0.0
    %67 = vmatpush1.msra.mxu0 0.0
    %68 = vmatprep.subr.mxu0 0.0
    %69 = vmatpush1.msra.mxu0 0.0
    %70 = vmatprep.subr.mxu0 0.0
    %71 = vmatpush1.msra.mxu0 0.0
    %72 = vmatprep.subr.mxu0 0.0
    %73 = vmatpush1.msra.mxu0 0.0
    %74 = vmatprep.subr.mxu0 0.0
    %75 = vmatpush1.msra.mxu0 0.0
    %76 = vmatprep.subr.mxu0 0.0
    %77 = vmatpush1.msra.mxu0 0.0
    %78 = vmatprep.subr.mxu0 0.0
    %79 = vmatpush1.msra.mxu0 0.0
    %80 = vmatprep.subr.mxu0 0.0
    %81 = vmatpush1.msra.mxu0 0.0
    %82 = vmatprep.subr.mxu0 0.0
    %83 = vmatpush1.msra.mxu0 0.0
    %84 = vmatprep.subr.mxu0 0.0
    %85 = vmatpush1.msra.mxu0 0.0
    %86 = vmatprep.subr.mxu0 0.0
    %87 = vmatpush1.msra.mxu0 0.0
    %88 = vmatprep.subr.mxu0 0.0
    %89 = vmatpush1.msra.mxu0 0.0
    %90 = vmatprep.subr.mxu0 0.0
    %91 = vmatpush1.msra.mxu0 %v18
    %92 = vmatprep.subr.mxu0 0.0
    %93 = vmatpush1.msra.mxu0 %v17
    %94 = vmatprep.subr.mxu0 0.0
    %95 = vmatpush2.msra.mxu0 0.0
    %96 = vmatprep.subr.mxu0 0.0
    %97 = vmatpush2.msra.mxu0 0.0
    %98 = vmatprep.subr.mxu0 0.0
    %99 = vmatpush2.msra.mxu0 0.0
    %100 = vmatprep.subr.mxu0 0.0
    %101 = vmatpush2.msra.mxu0 0.0
    %102 = vmatprep.subr.mxu0 0.0
    %103 = vmatpush2.msra.mxu0 0.0
    %104 = vmatprep.subr.mxu0 0.0
    %105 = vmatpush2.msra.mxu0 0.0
    %106 = vmatprep.subr.mxu0 0.0
    %107 = vmatpush2.msra.mxu0 0.0
    %108 = vmatprep.subr.mxu0 0.0
    %109 = vmatpush2.msra.mxu0 0.0
    %110 = vmatprep.subr.mxu0 0.0
    %111 = vmatpush2.msra.mxu0 0.0
    %112 = vmatprep.subr.mxu0 0.0
    %113 = vmatpush2.msra.mxu0 0.0
    %114 = vmatprep.subr.mxu0 0.0
    %115 = vmatpush2.msra.mxu0 0.0
    %116 = vmatprep.subr.mxu0 0.0
    %117 = vmatpush2.msra.mxu0 0.0
    %118 = vmatprep.subr.mxu0 0.0
    %119 = vmatpush2.msra.mxu0 0.0
    %120 = vmatprep.subr.mxu0 0.0
    %121 = vmatpush2.msra.mxu0 0.0
    %122 = vmatprep.subr.mxu0 0.0
    %123 = vmatpush2.msra.mxu0 0.0
    %124 = vmatprep.subr.mxu0 0.0
    %125 = vmatpush2.msra.mxu0 0.0
    %126 = vmatprep.mubr.f32.mxu0 0.0
    %127 = vmatmul.mubr.f32.gmra.mxu0 %v60
    %v128 = vpop.f32.mrf.mxu0
    %v129 = vadd.f32 %v24, %v128
    %v130 = vpop.f32.mrf.mxu0
    %131 = vdwg.mxu0
    %v132 = vmax.f32 %v129, 0.0
    %vm133 = vcmask 261120
    %134 = vst.msk [vmem:[#allocation2] sm:$0xff] %vm133, %v132
    // Predicated region
    $region14: #{mask_embedding_forward.1} parent=1 // pred_check
      _
    $region15: #{mask_embedding_forward.1} parent=1 // pred_check_branch
      %136 = sbr.rel (0) target = $region17
    $region16: #{mask_embedding_forward.1} parent=1 // pred_region
      %s138 = ssub.s32 128, 128
      %139 = vsyncadd [#allocation3], %s138
      %s141 = sshll.u32 [#allocation2], 4
      %s142 = int_to_ptr.vmem [resolvable:$true] %s141
      %144 = dma.vmem_to_hbm [thread:$0]  %s142, 128, %s3, [#allocation3]
    $region17: #{mask_embedding_forward.1} parent=1 // pred_fallthru
      _
    // Predicated region
    $region18: #{mask_embedding_forward.1} parent=1 // pred_check
      _
    $region19: #{mask_embedding_forward.1} parent=1 // pred_check_branch
      %146 = sbr.rel (0) target = $region21
    $region20: #{mask_embedding_forward.1} parent=1 // pred_region
      %147 = dma.done [#allocation3], 128
    $region21: #{mask_embedding_forward.1} parent=1 // pred_fallthru
      _
    %148 = vsyncpa [#allocation3], 1

</llo_original>
